<compile_context>
chip_gen: v7x
topology: tpu7x:2x2x1
jax: 0.10.0
libtpu: 0.0.40
codegen_flags: <defaults>
</compile_context>

<pallas_src>
import math

import jax
import jax.numpy as jnp
from jax.experimental import pallas as pl
from jax.experimental.pallas import tpu as pltpu


def _copy_kernel(x_ref, o_ref):
    # Identity copy of the current (block_rows, cols) window.
    o_ref[...] = x_ref[...]


_LANE_WIDTHS = (8192, 4096, 2048, 1024, 512, 256, 128)
# ~2 MiB blocks: near the HBM-roofline knee for copy-class kernels, and
# 2 operands x 2 pipeline buffers (~8 MiB) fits under every chip's
# scoped-VMEM default (v5e 16 MiB, v6e/v7x 32 MiB).
_TARGET_BLOCK_BYTES = 2 * 1024 * 1024


def _tile_plan(n_elems: int, itemsize: int):
    """Pick a lane/sublane-dense 2D slab (rows, cols) for the flat buffer plus
    a block_rows for tiling the row axis.  Returns None if no 128-multiple
    lane width divides n_elems (caller falls back to metadata-only reshape)."""
    # Sub-32-bit dtypes pack along sublanes: align row blocks accordingly so
    # stores stay full/unmasked (8 for f32, 16 for bf16, 32 for int8/fp8).
    sub_align = max(8, 32 // itemsize)

    divisors = [c for c in _LANE_WIDTHS if n_elems % c == 0]
    if not divisors:
        return None

    # Prefer the widest cols whose row count is sublane-aligned (dense slab);
    # otherwise just take the widest lane-dense cols available.
    cols = next((c for c in divisors if (n_elems // c) % sub_align == 0),
                divisors[0])
    rows = n_elems // cols

    target_rows = max(
        sub_align,
        (_TARGET_BLOCK_BYTES // (cols * itemsize)) // sub_align * sub_align,
    )

    if rows <= target_rows:
        block_rows = rows
        # If the whole copy would be a single grid step but the rows split
        # cleanly into two aligned blocks, use two blocks so v7x's two
        # TensorCores can both run (harmless on single-TC v5e/v6e).
        if rows % (2 * sub_align) == 0 and rows >= 2 * sub_align:
            block_rows = rows // 2
        return rows, cols, block_rows

    # Prefer an aligned divisor of rows (no ragged tail); otherwise fall back
    # to an aligned non-dividing block and let Pallas mask the boundary block.
    block_rows = target_rows
    for r in range(target_rows, sub_align - 1, -sub_align):
        if rows % r == 0:
            block_rows = r
            break
    return rows, cols, block_rows


def pallas_reshape(x: jax.Array, target_shape, *, copy: bool = False,
                   donate: bool = False) -> jax.Array:
    """Equivalent of torch: x.view((x.shape[0], *target_shape)).

    copy=False (default): metadata-only reshape, zero HBM traffic (the view).
    copy=True: materialize the result through a tiled Pallas identity copy.
    donate=True: alias the output onto the (flattened) input buffer; only use
    when the caller actually donates x and will not reuse it afterwards.
    """
    b = x.shape[0]
    f = math.prod(x.shape[1:])
    assert f == math.prod(target_shape), (
        f"cannot view {x.shape} as ({b}, {target_shape})"
    )
    out_shape = (b, *target_shape)

    if not copy:
        # A contiguous .view() is metadata-only; no kernel, no HBM traffic.
        return jnp.reshape(x, out_shape)

    n = b * f
    itemsize = jnp.dtype(x.dtype).itemsize
    plan = _tile_plan(n, itemsize)
    if plan is None:
        # Element count not a multiple of 128: a degenerate (1, n) block would
        # have 1/8 sublane occupancy and can exceed VMEM for large n, so just
        # do the metadata-only reshape instead of launching a kernel.
        # TODO(synk): wrapper-side lane padding would keep a tiled copy path
        # for large odd-sized tensors that truly need materialization.
        return jnp.reshape(x, out_shape)

    rows, cols, block_rows = plan

    # Metadata-only flatten to a sublane/lane-dense slab (batch folded in so
    # sublanes are fully occupied regardless of batch size).
    x_slab = jnp.reshape(x, (rows, cols))

    grid = (pl.cdiv(rows, block_rows),)
    y_slab = pl.pallas_call(
        _copy_kernel,
        out_shape=jax.ShapeDtypeStruct((rows, cols), x.dtype),
        grid_spec=pltpu.PrefetchScalarGridSpec(
            num_scalar_prefetch=0,
            grid=grid,
            in_specs=[pl.BlockSpec((block_rows, cols), lambda i: (i, 0))],
            out_specs=pl.BlockSpec((block_rows, cols), lambda i: (i, 0)),
        ),
        compiler_params=pltpu.CompilerParams(
            dimension_semantics=("parallel",),
        ),
        # Pure-bandwidth op: 0 flops, read + write of the whole buffer.
        cost_estimate=pl.CostEstimate(
            flops=0, transcendentals=0, bytes_accessed=2 * n * itemsize),
        # Only alias when the caller actually donates x; otherwise XLA would
        # insert a defensive copy and double the HBM traffic.
        input_output_aliases=({0: 0} if donate else {}),
    )(x_slab)

    # Zero-cost metadata reshape (the .view() itself).
    return jnp.reshape(y_slab, out_shape)


class Reshape:
    """Mirror of the PyTorch module's forward semantics."""

    def __init__(self, *shape: int):
        self.shape = shape

    def __call__(self, x: jax.Array, *, copy: bool = False) -> jax.Array:
        return pallas_reshape(x, self.shape, copy=copy)


if __name__ == "__main__":
    key = jax.random.PRNGKey(0)
    # Input: (batch=2, channels=4, H=16, W=16); Reshape(16, 64) -> (2, 16, 64)
    x = jax.random.normal(key, (2, 4, 16, 16), dtype=jnp.float32)
    mod = Reshape(16, 64)

    ref = jnp.reshape(x, (x.shape[0], 16, 64))

    # Default (fast) path: metadata-only view, no kernel launched.
    y_view = jax.block_until_ready(mod(x))
    assert y_view.shape == (2, 16, 64), y_view.shape
    assert y_view.dtype == x.dtype
    assert jnp.array_equal(y_view, ref), "mismatch vs reference reshape (view path)"

    # Explicit materializing path: exercises the Pallas identity-copy kernel.
    y_copy = jax.block_until_ready(mod(x, copy=True))
    assert y_copy.shape == (2, 16, 64), y_copy.shape
    assert y_copy.dtype == x.dtype
    assert jnp.array_equal(y_copy, ref), "mismatch vs reference reshape (copy path)"

    print("KERNEL_OK")
</pallas_src>

<mosaic_0001>
module attributes {stable_mosaic.version = 11 : i64} {
  func.func @_copy_kernel(%arg0: i32, %arg1: memref<8x256xf32, #tpu.memory_space<vmem>>, %arg2: memref<8x256xf32, #tpu.memory_space<vmem>>) attributes {dimension_semantics = [#tpu.dimension_semantics<parallel>], iteration_bounds = array<i64: 1>, scalar_prefetch = 0 : i64, scratch_operands = 0 : i64, tpu.core_type = #tpu.core_type<tc>, window_params = [{transform_indices = @transform_0, window_bounds = array<i64: 8, 256>}, {transform_indices = @transform_1, window_bounds = array<i64: 8, 256>}]} {
    %c0 = arith.constant 0 : index
    %c0_0 = arith.constant 0 : index
    %0 = vector.load %arg1[%c0, %c0_0] : memref<8x256xf32, #tpu.memory_space<vmem>>, vector<8x256xf32>
    %c0_1 = arith.constant 0 : index
    %c0_2 = arith.constant 0 : index
    %1 = vector.load %arg2[%c0_1, %c0_2] : memref<8x256xf32, #tpu.memory_space<vmem>>, vector<8x256xf32>
    tpu.vector_store %arg2[%c0_1, %c0_2], %0 {strides = array<i32>} : memref<8x256xf32, #tpu.memory_space<vmem>>, vector<8x256xf32>,
    return
  }
  func.func @transform_0(%arg0: i32) -> (i32, i32) {
    %c0_i32 = arith.constant 0 : i32
    %c0_i32_0 = arith.constant 0 : i32
    return %arg0, %c0_i32 : i32, i32
  }
  func.func @transform_1(%arg0: i32) -> (i32, i32) {
    %c0_i32 = arith.constant 0 : i32
    %c0_i32_0 = arith.constant 0 : i32
    return %arg0, %c0_i32 : i32, i32
  }
}

</mosaic_0001>

<llo_original>
// kernel: tpu_custom_call.1
$region0: #{tpu_custom_call.1}
  #allocation0 [shape = 'u32[]', space=smem, size = 0x4, offset = 0x4, fixed_abs, tag = 'smem constant byte address 0x4 - core index']
  #allocation1 [shape = 'u32[144,128]{1,0:T(1,128)}', space=vmem, size = 0x12000, scoped, tag = 'internal scratch']
  %s0 = inlined_call_operand.hbm [shape: f32[8,256], index: 0, kind: input, shape index: {}]
  %s1 = inlined_call_operand.hbm [shape: f32[8,256], index: 1, kind: output, shape index: {}]
  %s2 = sld [smem:[#allocation0]]
  $region18: #{tpu_custom_call.1} parent=0
    _
  %s4 = ssub.s32 1, %s2
  %s5 = scalar_select 0, %s4, %s2
  $region1: #{tpu_custom_call.1} parent=0
    #allocation2 [shape = 'u8[8192]{0}', space=vmem, size = 0x2000, scoped, tag = 'input window, operand 0, single buffered']
    #allocation3 [shape = 's32[1]{0}', space=sflag, size = 0x4, scoped, tag = 'scoped memory for tpu_custom_call.1']
    #allocation4 [shape = 's32[1]{0}', space=sflag, size = 0x4, scoped, tag = 'scoped memory for tpu_custom_call.1']
    #allocation5 [shape = 'u8[8192]{0}', space=vmem, size = 0x2000, scoped, tag = 'output window, operand 0, single buffered']
    %6 = vsyncpa [#allocation3], 0
    %7 = vsyncpa [#allocation4], 0
    // Predicated region
    $region2: #{tpu_custom_call.1} parent=1 // pred_check
      _
    $region3: #{tpu_custom_call.1} parent=1 // pred_check_branch
      %9 = sbr.rel (0) target = $region5
    $region4: #{tpu_custom_call.1} parent=1 // pred_region
      %s11 = ssub.s32 256, 256
      %12 = vsyncadd [#allocation3], %s11
      %s14 = sshll.u32 [#allocation2], 4
      %s15 = int_to_ptr.vmem [resolvable:$true] %s14
      %17 = dma.hbm_to_vmem [thread:$0]  %s0, 256, %s15, [#allocation3]
    $region5: #{tpu_custom_call.1} parent=1 // pred_fallthru
      _
    // Predicated region
    $region6: #{tpu_custom_call.1} parent=1 // pred_check
      _
    $region7: #{tpu_custom_call.1} parent=1 // pred_check_branch
      %19 = sbr.rel (0) target = $region9
    $region8: #{tpu_custom_call.1} parent=1 // pred_region
      %20 = dma.done [#allocation3], 256
    $region9: #{tpu_custom_call.1} parent=1 // pred_fallthru
      _
    %v21 = vld [vmem:[#allocation2] sm:$0xff]
    %v22 = vld [vmem:[#allocation2 + $0x8] sm:$0xff]
    %23 = vst [vmem:[#allocation5] sm:$0xff] %v21
    %24 = vst [vmem:[#allocation5 + $0x8] sm:$0xff] %v22
    // Predicated region
    $region10: #{tpu_custom_call.1} parent=1 // pred_check
      _
    $region11: #{tpu_custom_call.1} parent=1 // pred_check_branch
      %26 = sbr.rel (0) target = $region13
    $region12: #{tpu_custom_call.1} parent=1 // pred_region
      %s28 = ssub.s32 256, 256
      %29 = vsyncadd [#allocation4], %s28
      %s31 = sshll.u32 [#allocation5], 4
      %s32 = int_to_ptr.vmem [resolvable:$true] %s31
      %34 = dma.vmem_to_hbm [thread:$0]  %s32, 256, %s1, [#allocation4]
    $region13: #{tpu_custom_call.1} parent=1 // pred_fallthru
      _
    // Predicated region
    $region14: #{tpu_custom_call.1} parent=1 // pred_check
      _
    $region15: #{tpu_custom_call.1} parent=1 // pred_check_branch
      %36 = sbr.rel (0) target = $region17
    $region16: #{tpu_custom_call.1} parent=1 // pred_region
      %37 = dma.done [#allocation4], 256
    $region17: #{tpu_custom_call.1} parent=1 // pred_fallthru
      _
    %38 = vsyncpa [#allocation3], 1
    %39 = vsyncpa [#allocation4], 1

</llo_original>
